<compile_context>
chip_gen: v7x
topology: tpu7x:2x2x1
jax: 0.10.0
libtpu: 0.0.40
codegen_flags: <defaults>
</compile_context>

<pallas_src>
import functools

import jax
import jax.numpy as jnp
from jax.experimental import pallas as pl
from jax.experimental.pallas import tpu as pltpu


def _cka_kernel(s_ref, t_ref, out_ref,
                st_acc, ss_acc, tt_acc, s_sum, t_sum,
                *, eps, n_rows):
    k = pl.program_id(0)

    @pl.when(k == 0)
    def _init():
        st_acc[...] = jnp.zeros_like(st_acc)
        ss_acc[...] = jnp.zeros_like(ss_acc)
        tt_acc[...] = jnp.zeros_like(tt_acc)
        s_sum[...] = jnp.zeros_like(s_sum)
        t_sum[...] = jnp.zeros_like(t_sum)

    # Native-dtype tiles straight to the MXU; f32 accumulation.
    s = s_ref[...]
    t = t_ref[...]

    # Contract over the row axis of both operands (Gram accumulation) --
    # no materialized transpose of the (TILE_N, d) tiles.
    contract_rows = (((0,), (0,)), ((), ()))
    st_acc[...] += jax.lax.dot_general(
        s, t, contract_rows, preferred_element_type=jnp.float32)
    ss_acc[...] += jax.lax.dot_general(
        s, s, contract_rows, preferred_element_type=jnp.float32)
    tt_acc[...] += jax.lax.dot_general(
        t, t, contract_rows, preferred_element_type=jnp.float32)

    # Per-column sums (f32), used for the centering correction at the end.
    s_sum[...] += jnp.sum(s.astype(jnp.float32), axis=0, keepdims=True)
    t_sum[...] += jnp.sum(t.astype(jnp.float32), axis=0, keepdims=True)

    @pl.when(k == pl.num_programs(0) - 1)
    def _finalize():
        inv_n = jnp.float32(1.0 / n_rows)
        s_row = s_sum[...]                # (1, dS)
        t_row = t_sum[...]                # (1, dT)
        s_col = jnp.transpose(s_row)      # (dS, 1) -- tiny transpose
        t_col = jnp.transpose(t_row)      # (dT, 1)

        # Centered Grams: G_c = G - colsum_aᵀ colsum_b / N
        st_c = st_acc[...] - (s_col * t_row) * inv_n
        ss_c = ss_acc[...] - (s_col * s_row) * inv_n
        tt_c = tt_acc[...] - (t_col * t_row) * inv_n

        num = jnp.sqrt(jnp.sum(st_c * st_c))
        den1 = jnp.sqrt(jnp.sum(ss_c * ss_c)) + eps
        den2 = jnp.sqrt(jnp.sum(tt_c * tt_c)) + eps
        out_ref[...] = jnp.reshape(num / jnp.sqrt(den1 * den2), (1, 1))


def _round_up(x, m):
    return ((x + m - 1) // m) * m


def _sublane_align(dtype):
    # 8 sublanes for 4-byte dtypes, 16 for bf16, 32 for int8/fp8.
    return max(8, 32 // jnp.dtype(dtype).itemsize)


def cka_loss(SH, TH, eps=1e-8, tile_n=512):
    """Pallas TPU implementation of CKALoss.forward (streaming over rows)."""
    dS = SH.shape[-1]
    dT = TH.shape[-1]
    # No dtype cast in the wrapper: native (e.g. bf16) tiles go straight to
    # the MXU; accumulation is f32 inside the kernel.
    S = SH.reshape(-1, dS)
    T = TH.reshape(-1, dT)
    N = S.shape[0]
    assert T.shape[0] == N, "SH and TH must flatten to the same number of rows"

    align = max(_sublane_align(S.dtype), _sublane_align(T.dtype))
    tile_n = _round_up(min(tile_n, _round_up(N, align)), align)
    n_pad = _round_up(N, tile_n)
    if n_pad != N:
        # Zero rows contribute nothing to the Grams / column sums, and the
        # centering correction uses the true N, so padding is exact.
        S = jnp.pad(S, ((0, n_pad - N), (0, 0)))
        T = jnp.pad(T, ((0, n_pad - N), (0, 0)))

    grid = (n_pad // tile_n,)

    # VMEM budget: f32 accumulators + double-buffered input tiles, + headroom.
    acc_bytes = 4 * (dS * dT + dS * dS + dT * dT + 8 * (dS + dT))
    in_bytes = 2 * 2 * tile_n * (dS * S.dtype.itemsize + dT * T.dtype.itemsize)
    vmem_limit = int(min(max(acc_bytes + in_bytes + (4 << 20), 32 << 20),
                         120 << 20))

    out = pl.pallas_call(
        functools.partial(_cka_kernel, eps=float(eps), n_rows=float(N)),
        out_shape=jax.ShapeDtypeStruct((1, 1), jnp.float32),
        grid_spec=pltpu.PrefetchScalarGridSpec(
            num_scalar_prefetch=0,
            grid=grid,
            in_specs=[
                pl.BlockSpec((tile_n, dS), lambda k: (k, 0)),
                pl.BlockSpec((tile_n, dT), lambda k: (k, 0)),
            ],
            out_specs=pl.BlockSpec((1, 1), lambda k: (0, 0)),
            scratch_shapes=[
                pltpu.VMEM((dS, dT), jnp.float32),   # G_st accumulator
                pltpu.VMEM((dS, dS), jnp.float32),   # G_ss accumulator
                pltpu.VMEM((dT, dT), jnp.float32),   # G_tt accumulator
                pltpu.VMEM((1, dS), jnp.float32),    # column sums of S
                pltpu.VMEM((1, dT), jnp.float32),    # column sums of T
            ],
        ),
        compiler_params=pltpu.CompilerParams(
            dimension_semantics=("arbitrary",),      # row axis is a reduction
            vmem_limit_bytes=vmem_limit,
        ),
    )(S, T)
    return out[0, 0]


def _cka_ref(SH, TH, eps=1e-8):
    """Pure-JAX reference mirroring the PyTorch forward (in f32)."""
    dS = SH.shape[-1]
    dT = TH.shape[-1]
    S = SH.reshape(-1, dS).astype(jnp.float32)
    T = TH.reshape(-1, dT).astype(jnp.float32)
    S = S - S.mean(0, keepdims=True)
    T = T - T.mean(0, keepdims=True)
    num = jnp.linalg.norm(S.T @ T)
    den1 = jnp.linalg.norm(S.T @ S) + eps
    den2 = jnp.linalg.norm(T.T @ T) + eps
    return num / jnp.sqrt(den1 * den2)


if __name__ == "__main__":
    key = jax.random.PRNGKey(0)
    k1, k2, k3, k4, k5, k6 = jax.random.split(key, 6)

    # Case 1: small, exactly-tiled, f32 (spec shapes: batch=2, seq=8, hidden=32).
    SH1 = jax.random.normal(k1, (2, 8, 32), dtype=jnp.float32)
    TH1 = jax.random.normal(k2, (2, 8, 32), dtype=jnp.float32)
    out1 = cka_loss(SH1, TH1)
    jax.block_until_ready(out1)
    ref1 = _cka_ref(SH1, TH1)
    assert jnp.allclose(out1, ref1, rtol=1e-4, atol=1e-5), (out1, ref1)

    # Case 2: ragged N (needs zero-row padding), rectangular dS != dT, f32.
    SH2 = jax.random.normal(k3, (3, 7, 48), dtype=jnp.float32)
    TH2 = jax.random.normal(k4, (3, 7, 40), dtype=jnp.float32)
    out2 = cka_loss(SH2, TH2)
    jax.block_until_ready(out2)
    ref2 = _cka_ref(SH2, TH2)
    assert jnp.allclose(out2, ref2, rtol=1e-4, atol=1e-5), (out2, ref2)

    # Case 3: bf16 inputs, multi-step row reduction (grid > 1) with padding.
    SH3 = jax.random.normal(k5, (2, 600, 64), dtype=jnp.bfloat16)
    TH3 = jax.random.normal(k6, (2, 600, 96), dtype=jnp.bfloat16)
    out3 = cka_loss(SH3, TH3, tile_n=256)
    jax.block_until_ready(out3)
    ref3 = _cka_ref(SH3, TH3)
    assert jnp.allclose(out3, ref3, rtol=2e-3, atol=1e-5), (out3, ref3)

    print("KERNEL_OK")
</pallas_src>

<mosaic_0001>
module attributes {stable_mosaic.version = 11 : i64} {
  func.func @_cka_kernel(%arg0: i32, %arg1: memref<16x32xf32, #tpu.memory_space<vmem>>, %arg2: memref<16x32xf32, #tpu.memory_space<vmem>>, %arg3: memref<1x1xf32, #tpu.memory_space<vmem>>, %arg4: memref<32x32xf32, #tpu.memory_space<vmem>>, %arg5: memref<32x32xf32, #tpu.memory_space<vmem>>, %arg6: memref<32x32xf32, #tpu.memory_space<vmem>>, %arg7: memref<1x32xf32, #tpu.memory_space<vmem>>, %arg8: memref<1x32xf32, #tpu.memory_space<vmem>>) attributes {dimension_semantics = [#tpu.dimension_semantics<arbitrary>], iteration_bounds = array<i64: 1>, scalar_prefetch = 0 : i64, scratch_operands = 5 : i64, tpu.core_type = #tpu.core_type<tc>, window_params = [{transform_indices = @transform_0, window_bounds = array<i64: 16, 32>}, {transform_indices = @transform_1, window_bounds = array<i64: 16, 32>}, {pipeline_mode = #tpu.pipeline_mode<synchronous>, transform_indices = @transform_2, window_bounds = array<i64: 1, 1>}]} {
    %c0_i32 = arith.constant 0 : i32
    %0 = arith.cmpi eq, %arg0, %c0_i32 : i32
    %1 = arith.extui %0 : i1 to i32
    %c0_i32_0 = arith.constant 0 : i32
    %2 = arith.cmpi ne, %1, %c0_i32_0 : i32
    scf.if %2 {
      %cst_30 = arith.constant 0.000000e+00 : f32
      %30 = vector.broadcast %cst_30 : f32 to vector<32x32xf32>
      %c0_31 = arith.constant 0 : index
      %c0_32 = arith.constant 0 : index
      %31 = vector.load %arg4[%c0_31, %c0_32] : memref<32x32xf32, #tpu.memory_space<vmem>>, vector<32x32xf32>
      tpu.vector_store %arg4[%c0_31, %c0_32], %30 {strides = array<i32>} : memref<32x32xf32, #tpu.memory_space<vmem>>, vector<32x32xf32>,
      %cst_33 = arith.constant 0.000000e+00 : f32
      %32 = vector.broadcast %cst_33 : f32 to vector<32x32xf32>
      %c0_34 = arith.constant 0 : index
      %c0_35 = arith.constant 0 : index
      %33 = vector.load %arg5[%c0_34, %c0_35] : memref<32x32xf32, #tpu.memory_space<vmem>>, vector<32x32xf32>
      tpu.vector_store %arg5[%c0_34, %c0_35], %32 {strides = array<i32>} : memref<32x32xf32, #tpu.memory_space<vmem>>, vector<32x32xf32>,
      %cst_36 = arith.constant 0.000000e+00 : f32
      %34 = vector.broadcast %cst_36 : f32 to vector<32x32xf32>
      %c0_37 = arith.constant 0 : index
      %c0_38 = arith.constant 0 : index
      %35 = vector.load %arg6[%c0_37, %c0_38] : memref<32x32xf32, #tpu.memory_space<vmem>>, vector<32x32xf32>
      tpu.vector_store %arg6[%c0_37, %c0_38], %34 {strides = array<i32>} : memref<32x32xf32, #tpu.memory_space<vmem>>, vector<32x32xf32>,
      %cst_39 = arith.constant 0.000000e+00 : f32
      %36 = vector.broadcast %cst_39 : f32 to vector<1x32xf32>
      %c0_40 = arith.constant 0 : index
      %c0_41 = arith.constant 0 : index
      %37 = vector.load %arg7[%c0_40, %c0_41] : memref<1x32xf32, #tpu.memory_space<vmem>>, vector<1x32xf32>
      tpu.vector_store %arg7[%c0_40, %c0_41], %36 {strides = array<i32>} : memref<1x32xf32, #tpu.memory_space<vmem>>, vector<1x32xf32>,
      %cst_42 = arith.constant 0.000000e+00 : f32
      %38 = vector.broadcast %cst_42 : f32 to vector<1x32xf32>
      %c0_43 = arith.constant 0 : index
      %c0_44 = arith.constant 0 : index
      %39 = vector.load %arg8[%c0_43, %c0_44] : memref<1x32xf32, #tpu.memory_space<vmem>>, vector<1x32xf32>
      tpu.vector_store %arg8[%c0_43, %c0_44], %38 {strides = array<i32>} : memref<1x32xf32, #tpu.memory_space<vmem>>, vector<1x32xf32>,
    } else {
    }
    %c0 = arith.constant 0 : index
    %c0_1 = arith.constant 0 : index
    %3 = vector.load %arg1[%c0, %c0_1] : memref<16x32xf32, #tpu.memory_space<vmem>>, vector<16x32xf32>
    %c0_2 = arith.constant 0 : index
    %c0_3 = arith.constant 0 : index
    %4 = vector.load %arg2[%c0_2, %c0_3] : memref<16x32xf32, #tpu.memory_space<vmem>>, vector<16x32xf32>
    %c0_4 = arith.constant 0 : index
    %c0_5 = arith.constant 0 : index
    %5 = vector.load %arg4[%c0_4, %c0_5] : memref<32x32xf32, #tpu.memory_space<vmem>>, vector<32x32xf32>
    %cst = arith.constant dense<0.000000e+00> : vector<32x32xf32>
    %6 = tpu.matmul %3, %4, %cst {dimension_numbers = #tpu.dot_dimension_numbers<[0], [0], [1], [1], [0, 1, 1, 1], [], []>} : vector<16x32xf32>, vector<16x32xf32>, vector<32x32xf32> -> vector<32x32xf32>
    %7 = arith.addf %5, %6 : vector<32x32xf32>
    %c0_6 = arith.constant 0 : index
    %c0_7 = arith.constant 0 : index
    %8 = vector.load %arg4[%c0_6, %c0_7] : memref<32x32xf32, #tpu.memory_space<vmem>>, vector<32x32xf32>
    tpu.vector_store %arg4[%c0_6, %c0_7], %7 {strides = array<i32>} : memref<32x32xf32, #tpu.memory_space<vmem>>, vector<32x32xf32>,
    %c0_8 = arith.constant 0 : index
    %c0_9 = arith.constant 0 : index
    %9 = vector.load %arg5[%c0_8, %c0_9] : memref<32x32xf32, #tpu.memory_space<vmem>>, vector<32x32xf32>
    %cst_10 = arith.constant dense<0.000000e+00> : vector<32x32xf32>
    %10 = tpu.matmul %3, %3, %cst_10 {dimension_numbers = #tpu.dot_dimension_numbers<[0], [0], [1], [1], [0, 1, 1, 1], [], []>} : vector<16x32xf32>, vector<16x32xf32>, vector<32x32xf32> -> vector<32x32xf32>
    %11 = arith.addf %9, %10 : vector<32x32xf32>
    %c0_11 = arith.constant 0 : index
    %c0_12 = arith.constant 0 : index
    %12 = vector.load %arg5[%c0_11, %c0_12] : memref<32x32xf32, #tpu.memory_space<vmem>>, vector<32x32xf32>
    tpu.vector_store %arg5[%c0_11, %c0_12], %11 {strides = array<i32>} : memref<32x32xf32, #tpu.memory_space<vmem>>, vector<32x32xf32>,
    %c0_13 = arith.constant 0 : index
    %c0_14 = arith.constant 0 : index
    %13 = vector.load %arg6[%c0_13, %c0_14] : memref<32x32xf32, #tpu.memory_space<vmem>>, vector<32x32xf32>
    %cst_15 = arith.constant dense<0.000000e+00> : vector<32x32xf32>
    %14 = tpu.matmul %4, %4, %cst_15 {dimension_numbers = #tpu.dot_dimension_numbers<[0], [0], [1], [1], [0, 1, 1, 1], [], []>} : vector<16x32xf32>, vector<16x32xf32>, vector<32x32xf32> -> vector<32x32xf32>
    %15 = arith.addf %13, %14 : vector<32x32xf32>
    %c0_16 = arith.constant 0 : index
    %c0_17 = arith.constant 0 : index
    %16 = vector.load %arg6[%c0_16, %c0_17] : memref<32x32xf32, #tpu.memory_space<vmem>>, vector<32x32xf32>
    tpu.vector_store %arg6[%c0_16, %c0_17], %15 {strides = array<i32>} : memref<32x32xf32, #tpu.memory_space<vmem>>, vector<32x32xf32>,
    %c0_18 = arith.constant 0 : index
    %c0_19 = arith.constant 0 : index
    %17 = vector.load %arg7[%c0_18, %c0_19] : memref<1x32xf32, #tpu.memory_space<vmem>>, vector<1x32xf32>
    %cst_20 = arith.constant dense<0.000000e+00> : vector<32xf32>
    %18 = vector.multi_reduction <add>, %3, %cst_20 [0] : vector<16x32xf32> to vector<32xf32>
    %19 = vector.shape_cast %18 : vector<32xf32> to vector<1x32xf32>
    %20 = arith.addf %17, %19 : vector<1x32xf32>
    %c0_21 = arith.constant 0 : index
    %c0_22 = arith.constant 0 : index
    %21 = vector.load %arg7[%c0_21, %c0_22] : memref<1x32xf32, #tpu.memory_space<vmem>>, vector<1x32xf32>
    tpu.vector_store %arg7[%c0_21, %c0_22], %20 {strides = array<i32>} : memref<1x32xf32, #tpu.memory_space<vmem>>, vector<1x32xf32>,
    %c0_23 = arith.constant 0 : index
    %c0_24 = arith.constant 0 : index
    %22 = vector.load %arg8[%c0_23, %c0_24] : memref<1x32xf32, #tpu.memory_space<vmem>>, vector<1x32xf32>
    %cst_25 = arith.constant dense<0.000000e+00> : vector<32xf32>
    %23 = vector.multi_reduction <add>, %4, %cst_25 [0] : vector<16x32xf32> to vector<32xf32>
    %24 = vector.shape_cast %23 : vector<32xf32> to vector<1x32xf32>
    %25 = arith.addf %22, %24 : vector<1x32xf32>
    %c0_26 = arith.constant 0 : index
    %c0_27 = arith.constant 0 : index
    %26 = vector.load %arg8[%c0_26, %c0_27] : memref<1x32xf32, #tpu.memory_space<vmem>>, vector<1x32xf32>
    tpu.vector_store %arg8[%c0_26, %c0_27], %25 {strides = array<i32>} : memref<1x32xf32, #tpu.memory_space<vmem>>, vector<1x32xf32>,
    %c0_i32_28 = arith.constant 0 : i32
    %27 = arith.cmpi eq, %arg0, %c0_i32_28 : i32
    %28 = arith.extui %27 : i1 to i32
    %c0_i32_29 = arith.constant 0 : i32
    %29 = arith.cmpi ne, %28, %c0_i32_29 : i32
    scf.if %29 {
      %c0_30 = arith.constant 0 : index
      %c0_31 = arith.constant 0 : index
      %30 = vector.load %arg7[%c0_30, %c0_31] : memref<1x32xf32, #tpu.memory_space<vmem>>, vector<1x32xf32>
      %c0_32 = arith.constant 0 : index
      %c0_33 = arith.constant 0 : index
      %31 = vector.load %arg8[%c0_32, %c0_33] : memref<1x32xf32, #tpu.memory_space<vmem>>, vector<1x32xf32>
      %32 = tpu.transpose %30, [1, 0] : vector<1x32xf32> -> vector<32x1xf32>
      %33 = tpu.transpose %31, [1, 0] : vector<1x32xf32> -> vector<32x1xf32>
      %c0_34 = arith.constant 0 : index
      %c0_35 = arith.constant 0 : index
      %34 = vector.load %arg4[%c0_34, %c0_35] : memref<32x32xf32, #tpu.memory_space<vmem>>, vector<32x32xf32>
      %35 = vector.broadcast %32 : vector<32x1xf32> to vector<32x32xf32>
      %36 = vector.broadcast %31 : vector<1x32xf32> to vector<32x32xf32>
      %37 = arith.mulf %35, %36 : vector<32x32xf32>
      %cst_36 = arith.constant 6.250000e-02 : f32
      %38 = vector.broadcast %cst_36 : f32 to vector<32x32xf32>
      %39 = arith.mulf %37, %38 : vector<32x32xf32>
      %40 = arith.subf %34, %39 : vector<32x32xf32>
      %c0_37 = arith.constant 0 : index
      %c0_38 = arith.constant 0 : index
      %41 = vector.load %arg5[%c0_37, %c0_38] : memref<32x32xf32, #tpu.memory_space<vmem>>, vector<32x32xf32>
      %42 = vector.broadcast %32 : vector<32x1xf32> to vector<32x32xf32>
      %43 = vector.broadcast %30 : vector<1x32xf32> to vector<32x32xf32>
      %44 = arith.mulf %42, %43 : vector<32x32xf32>
      %cst_39 = arith.constant 6.250000e-02 : f32
      %45 = vector.broadcast %cst_39 : f32 to vector<32x32xf32>
      %46 = arith.mulf %44, %45 : vector<32x32xf32>
      %47 = arith.subf %41, %46 : vector<32x32xf32>
      %c0_40 = arith.constant 0 : index
      %c0_41 = arith.constant 0 : index
      %48 = vector.load %arg6[%c0_40, %c0_41] : memref<32x32xf32, #tpu.memory_space<vmem>>, vector<32x32xf32>
      %49 = vector.broadcast %33 : vector<32x1xf32> to vector<32x32xf32>
      %50 = vector.broadcast %31 : vector<1x32xf32> to vector<32x32xf32>
      %51 = arith.mulf %49, %50 : vector<32x32xf32>
      %cst_42 = arith.constant 6.250000e-02 : f32
      %52 = vector.broadcast %cst_42 : f32 to vector<32x32xf32>
      %53 = arith.mulf %51, %52 : vector<32x32xf32>
      %54 = arith.subf %48, %53 : vector<32x32xf32>
      %55 = arith.mulf %40, %40 : vector<32x32xf32>
      %56 = vector.shape_cast %55 : vector<32x32xf32> to vector<1x32x32xf32>
      %cst_43 = arith.constant dense<0.000000e+00> : vector<1xf32>
      %57 = vector.multi_reduction <add>, %56, %cst_43 [1, 2] : vector<1x32x32xf32> to vector<1xf32>
      %58 = vector.shape_cast %57 : vector<1xf32> to vector<1x1x1xf32>
      %59 = vector.extract %58[0, 0, 0] : f32 from vector<1x1x1xf32>
      %60 = math.sqrt %59 : f32
      %61 = arith.mulf %47, %47 : vector<32x32xf32>
      %62 = vector.shape_cast %61 : vector<32x32xf32> to vector<1x32x32xf32>
      %cst_44 = arith.constant dense<0.000000e+00> : vector<1xf32>
      %63 = vector.multi_reduction <add>, %62, %cst_44 [1, 2] : vector<1x32x32xf32> to vector<1xf32>
      %64 = vector.shape_cast %63 : vector<1xf32> to vector<1x1x1xf32>
      %65 = vector.extract %64[0, 0, 0] : f32 from vector<1x1x1xf32>
      %66 = math.sqrt %65 : f32
      %cst_45 = arith.constant 9.99999993E-9 : f32
      %67 = arith.addf %66, %cst_45 : f32
      %68 = arith.mulf %54, %54 : vector<32x32xf32>
      %69 = vector.shape_cast %68 : vector<32x32xf32> to vector<1x32x32xf32>
      %cst_46 = arith.constant dense<0.000000e+00> : vector<1xf32>
      %70 = vector.multi_reduction <add>, %69, %cst_46 [1, 2] : vector<1x32x32xf32> to vector<1xf32>
      %71 = vector.shape_cast %70 : vector<1xf32> to vector<1x1x1xf32>
      %72 = vector.extract %71[0, 0, 0] : f32 from vector<1x1x1xf32>
      %73 = math.sqrt %72 : f32
      %cst_47 = arith.constant 9.99999993E-9 : f32
      %74 = arith.addf %73, %cst_47 : f32
      %75 = arith.mulf %67, %74 : f32
      %76 = math.sqrt %75 : f32
      %77 = arith.divf %60, %76 : f32
      %78 = vector.broadcast %77 : f32 to vector<1x1xf32>
      %c0_48 = arith.constant 0 : index
      %c0_49 = arith.constant 0 : index
      %79 = vector.load %arg3[%c0_48, %c0_49] : memref<1x1xf32, #tpu.memory_space<vmem>>, vector<1x1xf32>
      tpu.vector_store %arg3[%c0_48, %c0_49], %78 {strides = array<i32>} : memref<1x1xf32, #tpu.memory_space<vmem>>, vector<1x1xf32>,
    } else {
    }
    return
  }
  func.func @transform_0(%arg0: i32) -> (i32, i32) {
    %c0_i32 = arith.constant 0 : i32
    %c0_i32_0 = arith.constant 0 : i32
    return %arg0, %c0_i32 : i32, i32
  }
  func.func @transform_1(%arg0: i32) -> (i32, i32) {
    %c0_i32 = arith.constant 0 : i32
    %c0_i32_0 = arith.constant 0 : i32
    return %arg0, %c0_i32 : i32, i32
  }
  func.func @transform_2(%arg0: i32) -> (i32, i32) {
    %c0_i32 = arith.constant 0 : i32
    %c0_i32_0 = arith.constant 0 : i32
    %c0_i32_1 = arith.constant 0 : i32
    return %c0_i32, %c0_i32_0 : i32, i32
  }
}

</mosaic_0001>

<llo_original>
// kernel: tpu_custom_call.1
$region0: #{tpu_custom_call.1}
  #allocation0 [shape = 'u32[]', space=smem, size = 0x4, offset = 0x4, fixed_abs, tag = 'smem constant byte address 0x4 - core index']
  #allocation1 [shape = 'u32[144,128]{1,0:T(1,128)}', space=vmem, size = 0x12000, scoped, tag = 'internal scratch']
  #allocation2 [shape = 'f32[32,32]{1,0:T(8,128)}', space=vmem, size = 0x4000, scoped, tag = 'scratch operand']
  #allocation3 [shape = 'f32[32,32]{1,0:T(8,128)}', space=vmem, size = 0x4000, scoped, tag = 'scratch operand']
  #allocation4 [shape = 'f32[32,32]{1,0:T(8,128)}', space=vmem, size = 0x4000, scoped, tag = 'scratch operand']
  #allocation5 [shape = 'f32[1,32]{1,0:T(1,128)}', space=vmem, size = 0x200, scoped, tag = 'scratch operand']
  #allocation6 [shape = 'f32[1,32]{1,0:T(1,128)}', space=vmem, size = 0x200, scoped, tag = 'scratch operand']
  %s0 = inlined_call_operand.hbm [shape: f32[16,32], index: 0, kind: input, shape index: {}]
  %s1 = inlined_call_operand.hbm [shape: f32[16,32], index: 1, kind: input, shape index: {}]
  %s2 = inlined_call_operand.hbm [shape: f32[1,1], index: 2, kind: output, shape index: {}]
  %s3 = sld [smem:[#allocation0]]
  $region34: #{tpu_custom_call.1} parent=0
    _
  %s5 = ssub.s32 1, %s3
  %s6 = scalar_select 0, %s5, %s3
  $region1: #{tpu_custom_call.1} parent=0
    #allocation7 [shape = 'u8[8192]{0}', space=vmem, size = 0x2000, scoped, tag = 'input window, operand 0, single buffered']
    #allocation8 [shape = 's32[1]{0}', space=sflag, size = 0x4, scoped, tag = 'scoped memory for tpu_custom_call.1']
    #allocation9 [shape = 's32[1]{0}', space=sflag, size = 0x4, scoped, tag = 'scoped memory for tpu_custom_call.1']
    #allocation10 [shape = 'u8[8192]{0}', space=vmem, size = 0x2000, scoped, tag = 'input window, operand 1, single buffered']
    #allocation11 [shape = 's32[1]{0}', space=sflag, size = 0x4, scoped, tag = 'scoped memory for tpu_custom_call.1']
    #allocation12 [shape = 'u8[512]{0}', space=vmem, size = 0x400, scoped, tag = 'output window, operand 0, single buffered']
    %7 = vsyncpa [#allocation8], 0
    %8 = vsyncpa [#allocation11], 0
    %9 = vsyncpa [#allocation9], 0
    // Predicated region
    $region2: #{tpu_custom_call.1} parent=1 // pred_check
      _
    $region3: #{tpu_custom_call.1} parent=1 // pred_check_branch
      %11 = sbr.rel (0) target = $region5
    $region4: #{tpu_custom_call.1} parent=1 // pred_region
      %s13 = ssub.s32 256, 256
      %14 = vsyncadd [#allocation8], %s13
      %s15 = sshll.u32 [#allocation7], 4
      %s16 = int_to_ptr.vmem [resolvable:$true] %s15
      %21 = dma.hbm_to_vmem [thread:$0]  %s0, 256, %s16, [#allocation8], 128, 128, 8
    $region5: #{tpu_custom_call.1} parent=1 // pred_fallthru
      _
    // Predicated region
    $region6: #{tpu_custom_call.1} parent=1 // pred_check
      _
    $region7: #{tpu_custom_call.1} parent=1 // pred_check_branch
      %23 = sbr.rel (0) target = $region9
    $region8: #{tpu_custom_call.1} parent=1 // pred_region
      %s25 = ssub.s32 256, 256
      %26 = vsyncadd [#allocation11], %s25
      %s27 = sshll.u32 [#allocation10], 4
      %s28 = int_to_ptr.vmem [resolvable:$true] %s27
      %33 = dma.hbm_to_vmem [thread:$0]  %s1, 256, %s28, [#allocation11], 128, 128, 8
    $region9: #{tpu_custom_call.1} parent=1 // pred_fallthru
      _
    // Predicated region
    $region10: #{tpu_custom_call.1} parent=1 // pred_check
      _
    $region11: #{tpu_custom_call.1} parent=1 // pred_check_branch
      %35 = sbr.rel (0) target = $region13
    $region12: #{tpu_custom_call.1} parent=1 // pred_region
      %36 = dma.done [#allocation8], 256
    $region13: #{tpu_custom_call.1} parent=1 // pred_fallthru
      _
    // Predicated region
    $region14: #{tpu_custom_call.1} parent=1 // pred_check
      _
    $region15: #{tpu_custom_call.1} parent=1 // pred_check_branch
      %38 = sbr.rel (0) target = $region17
    $region16: #{tpu_custom_call.1} parent=1 // pred_region
      %39 = dma.done [#allocation11], 256
    $region17: #{tpu_custom_call.1} parent=1 // pred_fallthru
      _
    %p40 = scmp.eq.s32.totalorder 0, 0
    // Predicated region
    $region18: #{tpu_custom_call.1} parent=1 // pred_check
      %p41 = pneg %p40
    $region19: #{tpu_custom_call.1} parent=1 // pred_check_branch
      %43 = sbr.rel (%p41) target = $region21
    $region20: #{tpu_custom_call.1} parent=1 // pred_region
      %vm44 = vcmask 261120
      %45 = vst.msk [vmem:[#allocation2] sm:$0xff] %vm44, 0.0
      %46 = vst.msk [vmem:[#allocation2 + $0x8] sm:$0xff] %vm44, 0.0
      %47 = vst.msk [vmem:[#allocation2 + $0x10] sm:$0xff] %vm44, 0.0
      %48 = vst.msk [vmem:[#allocation2 + $0x18] sm:$0xff] %vm44, 0.0
      %49 = vst.msk [vmem:[#allocation3] sm:$0xff] %vm44, 0.0
      %50 = vst.msk [vmem:[#allocation3 + $0x8] sm:$0xff] %vm44, 0.0
      %51 = vst.msk [vmem:[#allocation3 + $0x10] sm:$0xff] %vm44, 0.0
      %52 = vst.msk [vmem:[#allocation3 + $0x18] sm:$0xff] %vm44, 0.0
      %53 = vst.msk [vmem:[#allocation4] sm:$0xff] %vm44, 0.0
      %54 = vst.msk [vmem:[#allocation4 + $0x8] sm:$0xff] %vm44, 0.0
      %55 = vst.msk [vmem:[#allocation4 + $0x10] sm:$0xff] %vm44, 0.0
      %56 = vst.msk [vmem:[#allocation4 + $0x18] sm:$0xff] %vm44, 0.0
      %vm57 = vcmask 253952
      %58 = vst.msk [vmem:[#allocation5] sm:$0x1] %vm57, 0.0
      %59 = vst.msk [vmem:[#allocation6] sm:$0x1] %vm57, 0.0
    $region21: #{tpu_custom_call.1} parent=1 // pred_fallthru
      _
    %v60 = vld [vmem:[#allocation7] sm:$0xff]
    %v61 = vld [vmem:[#allocation7 + $0x8] sm:$0xff]
    %v62 = vld [vmem:[#allocation10] sm:$0xff]
    %v63 = vld [vmem:[#allocation10 + $0x8] sm:$0xff]
    %v64 = vld [vmem:[#allocation2] sm:$0xff]
    %v65 = vld [vmem:[#allocation2 + $0x8] sm:$0xff]
    %v66 = vld [vmem:[#allocation2 + $0x10] sm:$0xff]
    %v67 = vld [vmem:[#allocation2 + $0x18] sm:$0xff]
    %68 = vxpose.xlu0.b32.start [1/16] %v60, 128
    %69 = vxpose.xlu0.b32.cont [2/16] %v61, 128
    %70 = vxpose.xlu0.b32.cont [3/16] 0.0, 128
    %71 = vxpose.xlu0.b32.cont [4/16] 0.0, 128
    %72 = vxpose.xlu0.b32.cont [5/16] 0.0, 128
    %73 = vxpose.xlu0.b32.cont [6/16] 0.0, 128
    %74 = vxpose.xlu0.b32.cont [7/16] 0.0, 128
    %75 = vxpose.xlu0.b32.cont [8/16] 0.0, 128
    %76 = vxpose.xlu0.b32.cont [9/16] 0.0, 128
    %77 = vxpose.xlu0.b32.cont [10/16] 0.0, 128
    %78 = vxpose.xlu0.b32.cont [11/16] 0.0, 128
    %79 = vxpose.xlu0.b32.cont [12/16] 0.0, 128
    %80 = vxpose.xlu0.b32.cont [13/16] 0.0, 128
    %81 = vxpose.xlu0.b32.cont [14/16] 0.0, 128
    %82 = vxpose.xlu0.b32.cont [15/16] 0.0, 128
    %83 = vxpose.xlu0.b32.end [16/16] 0.0, 128
    %v84 = vpop.trf.xlu0
    %v85 = vpop.trf.xlu0
    %v86 = vpop.trf.xlu0
    %v87 = vpop.trf.xlu0
    %v88 = vpop.trf.xlu0
    %v89 = vpop.trf.xlu0
    %v90 = vpop.trf.xlu0
    %v91 = vpop.trf.xlu0
    %v92 = vpop.trf.xlu0
    %v93 = vpop.trf.xlu0
    %v94 = vpop.trf.xlu0
    %v95 = vpop.trf.xlu0
    %v96 = vpop.trf.xlu0
    %v97 = vpop.trf.xlu0
    %v98 = vpop.trf.xlu0
    %v99 = vpop.trf.xlu0
    %vm100 = vcmask 130048
    %v102 = vsel %vm100, %v84, 0
    %v105 = vsel %vm100, %v85, 0
    %v108 = vsel %vm100, %v86, 0
    %v111 = vsel %vm100, %v87, 0
    %113 = vmatprep.subr.mxu0 0.0
    %114 = vmatpush1.msra.mxu0 %v62
    %115 = vmatprep.subr.mxu0 0.0
    %116 = vmatpush1.msra.mxu0 %v63
    %117 = vmatprep.subr.mxu0 0.0
    %118 = vmatpush1.msra.mxu0 0.0
    %119 = vmatprep.subr.mxu0 0.0
    %120 = vmatpush1.msra.mxu0 0.0
    %121 = vmatprep.subr.mxu0 0.0
    %122 = vmatpush1.msra.mxu0 0.0
    %123 = vmatprep.subr.mxu0 0.0
    %124 = vmatpush1.msra.mxu0 0.0
    %125 = vmatprep.subr.mxu0 0.0
    %126 = vmatpush1.msra.mxu0 0.0
    %127 = vmatprep.subr.mxu0 0.0
    %128 = vmatpush1.msra.mxu0 0.0
    %129 = vmatprep.subr.mxu0 0.0
    %130 = vmatpush1.msra.mxu0 0.0
    %131 = vmatprep.subr.mxu0 0.0
    %132 = vmatpush1.msra.mxu0 0.0
    %133 = vmatprep.subr.mxu0 0.0
    %134 = vmatpush1.msra.mxu0 0.0
    %135 = vmatprep.subr.mxu0 0.0
    %136 = vmatpush1.msra.mxu0 0.0
    %137 = vmatprep.subr.mxu0 0.0
    %138 = vmatpush1.msra.mxu0 0.0
    %139 = vmatprep.subr.mxu0 0.0
    %140 = vmatpush1.msra.mxu0 0.0
    %141 = vmatprep.subr.mxu0 0.0
    %142 = vmatpush1.msra.mxu0 0.0
    %143 = vmatprep.subr.mxu0 0.0
    %144 = vmatpush1.msra.mxu0 0.0
    %145 = vmatprep.subr.mxu0 0.0
    %146 = vmatpush1.msra.mxu0 0.0
    %147 = vmatprep.subr.mxu0 0.0
    %148 = vmatpush1.msra.mxu0 0.0
    %149 = vmatprep.subr.mxu0 0.0
    %150 = vmatpush1.msra.mxu0 0.0
    %151 = vmatprep.subr.mxu0 0.0
    %152 = vmatpush1.msra.mxu0 0.0
    %153 = vmatprep.subr.mxu0 0.0
    %154 = vmatpush1.msra.mxu0 0.0
    %155 = vmatprep.subr.mxu0 0.0
    %156 = vmatpush1.msra.mxu0 0.0
    %157 = vmatprep.subr.mxu0 0.0
    %158 = vmatpush1.msra.mxu0 0.0
    %159 = vmatprep.subr.mxu0 0.0
    %160 = vmatpush1.msra.mxu0 0.0
    %161 = vmatprep.subr.mxu0 0.0
    %162 = vmatpush1.msra.mxu0 0.0
    %163 = vmatprep.subr.mxu0 0.0
    %164 = vmatpush1.msra.mxu0 0.0
    %165 = vmatprep.subr.mxu0 0.0
    %166 = vmatpush1.msra.mxu0 0.0
    %167 = vmatprep.subr.mxu0 0.0
    %168 = vmatpush1.msra.mxu0 0.0
    %169 = vmatprep.subr.mxu0 0.0
    %170 = vmatpush1.msra.mxu0 0.0
    %171 = vmatprep.subr.mxu0 0.0
    %172 = vmatpush1.msra.mxu0 0.0
    %173 = vmatprep.subr.mxu0 0.0
    %174 = vmatpush1.msra.mxu0 0.0
    %175 = vmatprep.subr.mxu0 0.0
    %176 = vmatpush1.msra.mxu0 0.0
    %177 = vmatprep.mubr.f32.mxu0 0.0
    %178 = vmatmul.mubr.f32.gmra.mrb[0].mxu0 %v102
    %v179 = vpop.f32.mrb[0].mxu0
    %v180 = vadd.f32 0.0, %v179
    %v181 = vpop.f32.mrb[0].mxu0
    %182 = vmatprep.mubr.f32.mxu0 0.0
    %183 = vmatmul.mubr.f32.gmra.mrb[0].mxu0 %v105
    %v184 = vpop.f32.mrb[0].mxu0
    %v185 = vadd.f32 0.0, %v184
    %v186 = vpop.f32.mrb[0].mxu0
    %187 = vmatprep.mubr.f32.mxu0 0.0
    %188 = vmatmul.mubr.f32.gmra.mrb[0].mxu0 %v108
    %v189 = vpop.f32.mrb[0].mxu0
    %v190 = vadd.f32 0.0, %v189
    %v191 = vpop.f32.mrb[0].mxu0
    %192 = vmatprep.mubr.f32.mxu0 0.0
    %193 = vmatmul.mubr.f32.gmra.mrb[0].mxu0 %v111
    %v194 = vpop.f32.mrb[0].mxu0
    %v195 = vadd.f32 0.0, %v194
    %v196 = vpop.f32.mrb[0].mxu0
    %197 = vdwg.mxu0
    %v198 = vadd.f32 %v64, %v180
    %v199 = vadd.f32 %v65, %v185
    %v200 = vadd.f32 %v66, %v190
    %v201 = vadd.f32 %v67, %v195
    %vm202 = vcmask 261120
    %203 = vst.msk [vmem:[#allocation2] sm:$0xff] %vm202, %v198
    %204 = vst.msk [vmem:[#allocation2 + $0x8] sm:$0xff] %vm202, %v199
    %205 = vst.msk [vmem:[#allocation2 + $0x10] sm:$0xff] %vm202, %v200
    %206 = vst.msk [vmem:[#allocation2 + $0x18] sm:$0xff] %vm202, %v201
    %v207 = vld [vmem:[#allocation3] sm:$0xff]
    %v208 = vld [vmem:[#allocation3 + $0x8] sm:$0xff]
    %v209 = vld [vmem:[#allocation3 + $0x10] sm:$0xff]
    %v210 = vld [vmem:[#allocation3 + $0x18] sm:$0xff]
    %211 = vmatprep.subr.mxu0 0.0
    %212 = vmatpush1.msra.mxu0 %v60
    %213 = vmatprep.subr.mxu0 0.0
    %214 = vmatpush1.msra.mxu0 %v61
    %215 = vmatprep.subr.mxu0 0.0
    %216 = vmatpush1.msra.mxu0 0.0
    %217 = vmatprep.subr.mxu0 0.0
    %218 = vmatpush1.msra.mxu0 0.0
    %219 = vmatprep.subr.mxu0 0.0
    %220 = vmatpush1.msra.mxu0 0.0
    %221 = vmatprep.subr.mxu0 0.0
    %222 = vmatpush1.msra.mxu0 0.0
    %223 = vmatprep.subr.mxu0 0.0
    %224 = vmatpush1.msra.mxu0 0.0
    %225 = vmatprep.subr.mxu0 0.0
    %226 = vmatpush1.msra.mxu0 0.0
    %227 = vmatprep.subr.mxu0 0.0
    %228 = vmatpush1.msra.mxu0 0.0
    %229 = vmatprep.subr.mxu0 0.0
    %230 = vmatpush1.msra.mxu0 0.0
    %231 = vmatprep.subr.mxu0 0.0
    %232 = vmatpush1.msra.mxu0 0.0
    %233 = vmatprep.subr.mxu0 0.0
    %234 = vmatpush1.msra.mxu0 0.0
    %235 = vmatprep.subr.mxu0 0.0
    %236 = vmatpush1.msra.mxu0 0.0
    %237 = vmatprep.subr.mxu0 0.0
    %238 = vmatpush1.msra.mxu0 0.0
    %239 = vmatprep.subr.mxu0 0.0
    %240 = vmatpush1.msra.mxu0 0.0
    %241 = vmatprep.subr.mxu0 0.0
    %242 = vmatpush1.msra.mxu0 0.0
    %243 = vmatprep.subr.mxu0 0.0
    %244 = vmatpush1.msra.mxu0 0.0
    %245 = vmatprep.subr.mxu0 0.0
    %246 = vmatpush1.msra.mxu0 0.0
    %247 = vmatprep.subr.mxu0 0.0
    %248 = vmatpush1.msra.mxu0 0.0
    %249 = vmatprep.subr.mxu0 0.0
    %250 = vmatpush1.msra.mxu0 0.0
    %251 = vmatprep.subr.mxu0 0.0
    %252 = vmatpush1.msra.mxu0 0.0
    %253 = vmatprep.subr.mxu0 0.0
    %254 = vmatpush1.msra.mxu0 0.0
    %255 = vmatprep.subr.mxu0 0.0
    %256 = vmatpush1.msra.mxu0 0.0
    %257 = vmatprep.subr.mxu0 0.0
    %258 = vmatpush1.msra.mxu0 0.0
    %259 = vmatprep.subr.mxu0 0.0
    %260 = vmatpush1.msra.mxu0 0.0
    %261 = vmatprep.subr.mxu0 0.0
    %262 = vmatpush1.msra.mxu0 0.0
    %263 = vmatprep.subr.mxu0 0.0
    %264 = vmatpush1.msra.mxu0 0.0
    %265 = vmatprep.subr.mxu0 0.0
    %266 = vmatpush1.msra.mxu0 0.0
    %267 = vmatprep.subr.mxu0 0.0
    %268 = vmatpush1.msra.mxu0 0.0
    %269 = vmatprep.subr.mxu0 0.0
    %270 = vmatpush1.msra.mxu0 0.0
    %271 = vmatprep.subr.mxu0 0.0
    %272 = vmatpush1.msra.mxu0 0.0
    %273 = vmatprep.subr.mxu0 0.0
    %274 = vmatpush1.msra.mxu0 0.0
    %275 = vmatprep.mubr.f32.mxu0 0.0
    %276 = vmatmul.mubr.f32.gmra.mrb[0].mxu0 %v102
    %v277 = vpop.f32.mrb[0].mxu0
    %v278 = vadd.f32 0.0, %v277
    %v279 = vpop.f32.mrb[0].mxu0
    %280 = vmatprep.mubr.f32.mxu0 0.0
    %281 = vmatmul.mubr.f32.gmra.mrb[0].mxu0 %v105
    %v282 = vpop.f32.mrb[0].mxu0
    %v283 = vadd.f32 0.0, %v282
    %v284 = vpop.f32.mrb[0].mxu0
    %285 = vmatprep.mubr.f32.mxu0 0.0
    %286 = vmatmul.mubr.f32.gmra.mrb[0].mxu0 %v108
    %v287 = vpop.f32.mrb[0].mxu0
    %v288 = vadd.f32 0.0, %v287
    %v289 = vpop.f32.mrb[0].mxu0
    %290 = vmatprep.mubr.f32.mxu0 0.0
    %291 = vmatmul.mubr.f32.gmra.mrb[0].mxu0 %v111
    %v292 = vpop.f32.mrb[0].mxu0
    %v293 = vadd.f32 0.0, %v292
    %v294 = vpop.f32.mrb[0].mxu0
    %295 = vdwg.mxu0
    %v296 = vadd.f32 %v207, %v278
    %v297 = vadd.f32 %v208, %v283
    %v298 = vadd.f32 %v209, %v288
    %v299 = vadd.f32 %v210, %v293
    %300 = vst.msk [vmem:[#allocation3] sm:$0xff] %vm202, %v296
    %301 = vst.msk [vmem:[#allocation3 + $0x8] sm:$0xff] %vm202, %v297
    %302 = vst.msk [vmem:[#allocation3 + $0x10] sm:$0xff] %vm202, %v298
    %303 = vst.msk [vmem:[#allocation3 + $0x18] sm:$0xff] %vm202, %v299
    %v304 = vld [vmem:[#allocation4] sm:$0xff]
    %v305 = vld [vmem:[#allocation4 + $0x8] sm:$0xff]
    %v306 = vld [vmem:[#allocation4 + $0x10] sm:$0xff]
    %v307 = vld [vmem:[#allocation4 + $0x18] sm:$0xff]
    %308 = vxpose.xlu0.b32.start [1/16] %v62, 128
    %309 = vxpose.xlu0.b32.cont [2/16] %v63, 128
    %310 = vxpose.xlu0.b32.cont [3/16] 0.0, 128
    %311 = vxpose.xlu0.b32.cont [4/16] 0.0, 128
    %312 = vxpose.xlu0.b32.cont [5/16] 0.0, 128
    %313 = vxpose.xlu0.b32.cont [6/16] 0.0, 128
    %314 = vxpose.xlu0.b32.cont [7/16] 0.0, 128
    %315 = vxpose.xlu0.b32.cont [8/16] 0.0, 128
    %316 = vxpose.xlu0.b32.cont [9/16] 0.0, 128
    %317 = vxpose.xlu0.b32.cont [10/16] 0.0, 128
    %318 = vxpose.xlu0.b32.cont [11/16] 0.0, 128
    %319 = vxpose.xlu0.b32.cont [12/16] 0.0, 128
    %320 = vxpose.xlu0.b32.cont [13/16] 0.0, 128
    %321 = vxpose.xlu0.b32.cont [14/16] 0.0, 128
    %322 = vxpose.xlu0.b32.cont [15/16] 0.0, 128
    %323 = vxpose.xlu0.b32.end [16/16] 0.0, 128
    %v324 = vpop.trf.xlu0
    %v325 = vpop.trf.xlu0
    %v326 = vpop.trf.xlu0
    %v327 = vpop.trf.xlu0
    %v328 = vpop.trf.xlu0
    %v329 = vpop.trf.xlu0
    %v330 = vpop.trf.xlu0
    %v331 = vpop.trf.xlu0
    %v332 = vpop.trf.xlu0
    %v333 = vpop.trf.xlu0
    %v334 = vpop.trf.xlu0
    %v335 = vpop.trf.xlu0
    %v336 = vpop.trf.xlu0
    %v337 = vpop.trf.xlu0
    %v338 = vpop.trf.xlu0
    %v339 = vpop.trf.xlu0
    %v341 = vsel %vm100, %v324, 0
    %v344 = vsel %vm100, %v325, 0
    %v347 = vsel %vm100, %v326, 0
    %v350 = vsel %vm100, %v327, 0
    %352 = vmatprep.subr.mxu0 0.0
    %353 = vmatpush1.msra.mxu0 %v62
    %354 = vmatprep.subr.mxu0 0.0
    %355 = vmatpush1.msra.mxu0 %v63
    %356 = vmatprep.subr.mxu0 0.0
    %357 = vmatpush1.msra.mxu0 0.0
    %358 = vmatprep.subr.mxu0 0.0
    %359 = vmatpush1.msra.mxu0 0.0
    %360 = vmatprep.subr.mxu0 0.0
    %361 = vmatpush1.msra.mxu0 0.0
    %362 = vmatprep.subr.mxu0 0.0
    %363 = vmatpush1.msra.mxu0 0.0
    %364 = vmatprep.subr.mxu0 0.0
    %365 = vmatpush1.msra.mxu0 0.0
    %366 = vmatprep.subr.mxu0 0.0
    %367 = vmatpush1.msra.mxu0 0.0
    %368 = vmatprep.subr.mxu0 0.0
    %369 = vmatpush1.msra.mxu0 0.0
    %370 = vmatprep.subr.mxu0 0.0
    %371 = vmatpush1.msra.mxu0 0.0
    %372 = vmatprep.subr.mxu0 0.0
    %373 = vmatpush1.msra.mxu0 0.0
    %374 = vmatprep.subr.mxu0 0.0
    %375 = vmatpush1.msra.mxu0 0.0
    %376 = vmatprep.subr.mxu0 0.0
    %377 = vmatpush1.msra.mxu0 0.0
    %378 = vmatprep.subr.mxu0 0.0
    %379 = vmatpush1.msra.mxu0 0.0
    %380 = vmatprep.subr.mxu0 0.0
    %381 = vmatpush1.msra.mxu0 0.0
    %382 = vmatprep.subr.mxu0 0.0
    %383 = vmatpush1.msra.mxu0 0.0
    %384 = vmatprep.subr.mxu0 0.0
    %385 = vmatpush1.msra.mxu0 0.0
    %386 = vmatprep.subr.mxu0 0.0
    %387 = vmatpush1.msra.mxu0 0.0
    %388 = vmatprep.subr.mxu0 0.0
    %389 = vmatpush1.msra.mxu0 0.0
    %390 = vmatprep.subr.mxu0 0.0
    %391 = vmatpush1.msra.mxu0 0.0
    %392 = vmatprep.subr.mxu0 0.0
    %393 = vmatpush1.msra.mxu0 0.0
    %394 = vmatprep.subr.mxu0 0.0
    %395 = vmatpush1.msra.mxu0 0.0
    %396 = vmatprep.subr.mxu0 0.0
    %397 = vmatpush1.msra.mxu0 0.0
    %398 = vmatprep.subr.mxu0 0.0
    %399 = vmatpush1.msra.mxu0 0.0
    %400 = vmatprep.subr.mxu0 0.0
    %401 = vmatpush1.msra.mxu0 0.0
    %402 = vmatprep.subr.mxu0 0.0
    %403 = vmatpush1.msra.mxu0 0.0
    %404 = vmatprep.subr.mxu0 0.0
    %405 = vmatpush1.msra.mxu0 0.0
    %406 = vmatprep.subr.mxu0 0.0
    %407 = vmatpush1.msra.mxu0 0.0
    %408 = vmatprep.subr.mxu0 0.0
    %409 = vmatpush1.msra.mxu0 0.0
    %410 = vmatprep.subr.mxu0 0.0
    %411 = vmatpush1.msra.mxu0 0.0
    %412 = vmatprep.subr.mxu0 0.0
    %413 = vmatpush1.msra.mxu0 0.0
    %414 = vmatprep.subr.mxu0 0.0
    %415 = vmatpush1.msra.mxu0 0.0
    %416 = vmatprep.mubr.f32.mxu0 0.0
    %417 = vmatmul.mubr.f32.gmra.mrb[0].mxu0 %v341
    %v418 = vpop.f32.mrb[0].mxu0
    %v419 = vadd.f32 0.0, %v418
    %v420 = vpop.f32.mrb[0].mxu0
    %421 = vmatprep.mubr.f32.mxu0 0.0
    %422 = vmatmul.mubr.f32.gmra.mrb[0].mxu0 %v344
    %v423 = vpop.f32.mrb[0].mxu0
    %v424 = vadd.f32 0.0, %v423
    %v425 = vpop.f32.mrb[0].mxu0
    %426 = vmatprep.mubr.f32.mxu0 0.0
    %427 = vmatmul.mubr.f32.gmra.mrb[0].mxu0 %v347
    %v428 = vpop.f32.mrb[0].mxu0
    %v429 = vadd.f32 0.0, %v428
    %v430 = vpop.f32.mrb[0].mxu0
    %431 = vmatprep.mubr.f32.mxu0 0.0
    %432 = vmatmul.mubr.f32.gmra.mrb[0].mxu0 %v350
    %v433 = vpop.f32.mrb[0].mxu0
    %v434 = vadd.f32 0.0, %v433
    %v435 = vpop.f32.mrb[0].mxu0
    %436 = vdwg.mxu0
    %v437 = vadd.f32 %v304, %v419
    %v438 = vadd.f32 %v305, %v424
    %v439 = vadd.f32 %v306, %v429
    %v440 = vadd.f32 %v307, %v434
    %441 = vst.msk [vmem:[#allocation4] sm:$0xff] %vm202, %v437
    %442 = vst.msk [vmem:[#allocation4 + $0x8] sm:$0xff] %vm202, %v438
    %443 = vst.msk [vmem:[#allocation4 + $0x10] sm:$0xff] %vm202, %v439
    %444 = vst.msk [vmem:[#allocation4 + $0x18] sm:$0xff] %vm202, %v440
    %v445 = vld [vmem:[#allocation5] sm:$0x1]
    %v446 = vsel %vm202, %v60, 0.0
    %v447 = vsel %vm202, %v61, 0.0
    %v448 = vadd.f32 %v446, %v447
    %v449 = vrot.slane %v448, 4
    %v450 = vadd.f32 %v448, %v449
    %v451 = vrot.slane %v450, 2
    %v452 = vadd.f32 %v450, %v451
    %v453 = vrot.slane %v452, 1
    %v454 = vadd.f32 %v452, %v453
    %v455 = vadd.f32 %v445, %v454
    %vm456 = vcmask 253952
    %457 = vst.msk [vmem:[#allocation5] sm:$0x1] %vm456, %v455
    %v458 = vld [vmem:[#allocation6] sm:$0x1]
    %v459 = vsel %vm202, %v62, 0.0
    %v460 = vsel %vm202, %v63, 0.0
    %v461 = vadd.f32 %v459, %v460
    %v462 = vrot.slane %v461, 4
    %v463 = vadd.f32 %v461, %v462
    %v464 = vrot.slane %v463, 2
    %v465 = vadd.f32 %v463, %v464
    %v466 = vrot.slane %v465, 1
    %v467 = vadd.f32 %v465, %v466
    %v468 = vadd.f32 %v458, %v467
    %469 = vst.msk [vmem:[#allocation6] sm:$0x1] %vm456, %v468
    // Predicated region
    $region22: #{tpu_custom_call.1} parent=1 // pred_check
      %p470 = pneg %p40
    $region23: #{tpu_custom_call.1} parent=1 // pred_check_branch
      %472 = sbr.rel (%p470) target = $region25
    $region24: #{tpu_custom_call.1} parent=1 // pred_region
      %v473 = vld [vmem:[#allocation5] sm:$0x1]
      %v474 = vld [vmem:[#allocation6] sm:$0x1]
      %475 = vxpose.xlu0.b32.start [1/16] %v473, 128
      %476 = vxpose.xlu0.b32.cont [2/16] 0.0, 128
      %477 = vxpose.xlu0.b32.cont [3/16] 0.0, 128
      %478 = vxpose.xlu0.b32.cont [4/16] 0.0, 128
      %479 = vxpose.xlu0.b32.cont [5/16] 0.0, 128
      %480 = vxpose.xlu0.b32.cont [6/16] 0.0, 128
      %481 = vxpose.xlu0.b32.cont [7/16] 0.0, 128
      %482 = vxpose.xlu0.b32.cont [8/16] 0.0, 128
      %483 = vxpose.xlu0.b32.cont [9/16] 0.0, 128
      %484 = vxpose.xlu0.b32.cont [10/16] 0.0, 128
      %485 = vxpose.xlu0.b32.cont [11/16] 0.0, 128
      %486 = vxpose.xlu0.b32.cont [12/16] 0.0, 128
      %487 = vxpose.xlu0.b32.cont [13/16] 0.0, 128
      %488 = vxpose.xlu0.b32.cont [14/16] 0.0, 128
      %489 = vxpose.xlu0.b32.cont [15/16] 0.0, 128
      %490 = vxpose.xlu0.b32.end [16/16] 0.0, 128
      %v491 = vpop.trf.xlu0
      %v492 = vpop.trf.xlu0
      %v493 = vpop.trf.xlu0
      %v494 = vpop.trf.xlu0
      %v495 = vpop.trf.xlu0
      %v496 = vpop.trf.xlu0
      %v497 = vpop.trf.xlu0
      %v498 = vpop.trf.xlu0
      %v499 = vpop.trf.xlu0
      %v500 = vpop.trf.xlu0
      %v501 = vpop.trf.xlu0
      %v502 = vpop.trf.xlu0
      %v503 = vpop.trf.xlu0
      %v504 = vpop.trf.xlu0
      %v505 = vpop.trf.xlu0
      %v506 = vpop.trf.xlu0
      %507 = vxpose.xlu0.b32.start [1/16] %v474, 128
      %508 = vxpose.xlu0.b32.cont [2/16] 0.0, 128
      %509 = vxpose.xlu0.b32.cont [3/16] 0.0, 128
      %510 = vxpose.xlu0.b32.cont [4/16] 0.0, 128
      %511 = vxpose.xlu0.b32.cont [5/16] 0.0, 128
      %512 = vxpose.xlu0.b32.cont [6/16] 0.0, 128
      %513 = vxpose.xlu0.b32.cont [7/16] 0.0, 128
      %514 = vxpose.xlu0.b32.cont [8/16] 0.0, 128
      %515 = vxpose.xlu0.b32.cont [9/16] 0.0, 128
      %516 = vxpose.xlu0.b32.cont [10/16] 0.0, 128
      %517 = vxpose.xlu0.b32.cont [11/16] 0.0, 128
      %518 = vxpose.xlu0.b32.cont [12/16] 0.0, 128
      %519 = vxpose.xlu0.b32.cont [13/16] 0.0, 128
      %520 = vxpose.xlu0.b32.cont [14/16] 0.0, 128
      %521 = vxpose.xlu0.b32.cont [15/16] 0.0, 128
      %522 = vxpose.xlu0.b32.end [16/16] 0.0, 128
      %v523 = vpop.trf.xlu0
      %v524 = vpop.trf.xlu0
      %v525 = vpop.trf.xlu0
      %v526 = vpop.trf.xlu0
      %v527 = vpop.trf.xlu0
      %v528 = vpop.trf.xlu0
      %v529 = vpop.trf.xlu0
      %v530 = vpop.trf.xlu0
      %v531 = vpop.trf.xlu0
      %v532 = vpop.trf.xlu0
      %v533 = vpop.trf.xlu0
      %v534 = vpop.trf.xlu0
      %v535 = vpop.trf.xlu0
      %v536 = vpop.trf.xlu0
      %v537 = vpop.trf.xlu0
      %v538 = vpop.trf.xlu0
      %v539 = vld [vmem:[#allocation2] sm:$0xff]
      %v540 = vld [vmem:[#allocation2 + $0x8] sm:$0xff]
      %v541 = vld [vmem:[#allocation2 + $0x10] sm:$0xff]
      %v542 = vld [vmem:[#allocation2 + $0x18] sm:$0xff]
      %544 = vset.pattern.permute.xlu0 0
      %545 = vperm.xlu0 %544, %v491
      %v546 = vpop.permute.xlu0 %545
      %549 = vset.pattern.permute.xlu0 0
      %550 = vperm.xlu0 %549, %v492
      %v551 = vpop.permute.xlu0 %550
      %554 = vset.pattern.permute.xlu0 0
      %555 = vperm.xlu0 %554, %v493
      %v556 = vpop.permute.xlu0 %555
      %559 = vset.pattern.permute.xlu0 0
      %560 = vperm.xlu0 %559, %v494
      %v561 = vpop.permute.xlu0 %560
      %v564 = vlaneseq
      %v565 = vshrl.u32 %v564, 7
      %v566 = vsub.s32 0, %v565
      %v567 = vrot.slane %v474, %v566
      %v569 = vmul.f32 %v546, %v567
      %v570 = vmul.f32 %v551, %v567
      %v571 = vmul.f32 %v556, %v567
      %v572 = vmul.f32 %v561, %v567
      %v573 = vmul.f32 %v569, 0.0625
      %v574 = vmul.f32 %v570, 0.0625
      %v575 = vmul.f32 %v571, 0.0625
      %v576 = vmul.f32 %v572, 0.0625
      %v577 = vsub.f32 %v539, %v573
      %v578 = vsub.f32 %v540, %v574
      %v579 = vsub.f32 %v541, %v575
      %v580 = vsub.f32 %v542, %v576
      %v581 = vld [vmem:[#allocation3] sm:$0xff]
      %v582 = vld [vmem:[#allocation3 + $0x8] sm:$0xff]
      %v583 = vld [vmem:[#allocation3 + $0x10] sm:$0xff]
      %v584 = vld [vmem:[#allocation3 + $0x18] sm:$0xff]
      %v586 = vlaneseq
      %v587 = vshrl.u32 %v586, 7
      %v588 = vsub.s32 0, %v587
      %v589 = vrot.slane %v473, %v588
      %v591 = vmul.f32 %v546, %v589
      %v592 = vmul.f32 %v551, %v589
      %v593 = vmul.f32 %v556, %v589
      %v594 = vmul.f32 %v561, %v589
      %v595 = vmul.f32 %v591, 0.0625
      %v596 = vmul.f32 %v592, 0.0625
      %v597 = vmul.f32 %v593, 0.0625
      %v598 = vmul.f32 %v594, 0.0625
      %v599 = vsub.f32 %v581, %v595
      %v600 = vsub.f32 %v582, %v596
      %v601 = vsub.f32 %v583, %v597
      %v602 = vsub.f32 %v584, %v598
      %v603 = vld [vmem:[#allocation4] sm:$0xff]
      %v604 = vld [vmem:[#allocation4 + $0x8] sm:$0xff]
      %v605 = vld [vmem:[#allocation4 + $0x10] sm:$0xff]
      %v606 = vld [vmem:[#allocation4 + $0x18] sm:$0xff]
      %608 = vset.pattern.permute.xlu0 0
      %609 = vperm.xlu0 %608, %v523
      %v610 = vpop.permute.xlu0 %609
      %613 = vset.pattern.permute.xlu0 0
      %614 = vperm.xlu0 %613, %v524
      %v615 = vpop.permute.xlu0 %614
      %618 = vset.pattern.permute.xlu0 0
      %619 = vperm.xlu0 %618, %v525
      %v620 = vpop.permute.xlu0 %619
      %623 = vset.pattern.permute.xlu0 0
      %624 = vperm.xlu0 %623, %v526
      %v625 = vpop.permute.xlu0 %624
      %v627 = vmul.f32 %v610, %v567
      %v628 = vmul.f32 %v615, %v567
      %v629 = vmul.f32 %v620, %v567
      %v630 = vmul.f32 %v625, %v567
      %v631 = vmul.f32 %v627, 0.0625
      %v632 = vmul.f32 %v628, 0.0625
      %v633 = vmul.f32 %v629, 0.0625
      %v634 = vmul.f32 %v630, 0.0625
      %v635 = vsub.f32 %v603, %v631
      %v636 = vsub.f32 %v604, %v632
      %v637 = vsub.f32 %v605, %v633
      %v638 = vsub.f32 %v606, %v634
      %v639 = vmul.f32 %v577, %v577
      %v640 = vmul.f32 %v578, %v578
      %v641 = vmul.f32 %v579, %v579
      %v642 = vmul.f32 %v580, %v580
      %v643 = vsel %vm202, %v639, 0.0
      %v644 = vsel %vm202, %v640, 0.0
      %v645 = vadd.f32 %v643, %v644
      %v646 = vsel %vm202, %v641, 0.0
      %v647 = vadd.f32 %v645, %v646
      %v648 = vsel %vm202, %v642, 0.0
      %v649 = vadd.f32 %v647, %v648
      %650 = vadd.xlane.f32.xlu0 %v649
      %v651 = vpop.xlane.xlu0 %650
      %v652 = vrot.slane %v651, 4
      %v653 = vadd.f32 %v651, %v652
      %v654 = vrot.slane %v653, 2
      %v655 = vadd.f32 %v653, %v654
      %v656 = vrot.slane %v655, 1
      %v657 = vadd.f32 %v655, %v656
      %s658 = vtos %v657
      %v659 = vstv %s658
      %v660 = vrsqrt.pop %v659
      %v661 = vmul.f32 %v659, %v660
      %vm662 = vcmp.eq.f32.partialorder %v659, inf
      %v663 = vsel %vm662, %v659, %v661
      %vm664 = vcmp.eq.f32.partialorder %v659, 0.0
      %v665 = vand.u32 %v659, 2147483648
      %v666 = vsel %vm664, %v665, %v663
      %s667 = vtos %v666
      %v668 = vmul.f32 %v599, %v599
      %v669 = vmul.f32 %v600, %v600
      %v670 = vmul.f32 %v601, %v601
      %v671 = vmul.f32 %v602, %v602
      %v672 = vsel %vm202, %v668, 0.0
      %v673 = vsel %vm202, %v669, 0.0
      %v674 = vadd.f32 %v672, %v673
      %v675 = vsel %vm202, %v670, 0.0
      %v676 = vadd.f32 %v674, %v675
      %v677 = vsel %vm202, %v671, 0.0
      %v678 = vadd.f32 %v676, %v677
      %679 = vadd.xlane.f32.xlu0 %v678
      %v680 = vpop.xlane.xlu0 %679
      %v681 = vrot.slane %v680, 4
      %v682 = vadd.f32 %v680, %v681
      %v683 = vrot.slane %v682, 2
      %v684 = vadd.f32 %v682, %v683
      %v685 = vrot.slane %v684, 1
      %v686 = vadd.f32 %v684, %v685
      %s687 = vtos %v686
      %v688 = vstv %s687
      %v689 = vrsqrt.pop %v688
      %v690 = vmul.f32 %v688, %v689
      %vm691 = vcmp.eq.f32.partialorder %v688, inf
      %v692 = vsel %vm691, %v688, %v690
      %vm693 = vcmp.eq.f32.partialorder %v688, 0.0
      %v694 = vand.u32 %v688, 2147483648
      %v695 = vsel %vm693, %v694, %v692
      %s696 = vtos %v695
      %s697 = sadd.f32 %s696, 1e-08
      %v698 = vmul.f32 %v635, %v635
      %v699 = vmul.f32 %v636, %v636
      %v700 = vmul.f32 %v637, %v637
      %v701 = vmul.f32 %v638, %v638
      %v702 = vsel %vm202, %v698, 0.0
      %v703 = vsel %vm202, %v699, 0.0
      %v704 = vadd.f32 %v702, %v703
      %v705 = vsel %vm202, %v700, 0.0
      %v706 = vadd.f32 %v704, %v705
      %v707 = vsel %vm202, %v701, 0.0
      %v708 = vadd.f32 %v706, %v707
      %709 = vadd.xlane.f32.xlu0 %v708
      %v710 = vpop.xlane.xlu0 %709
      %v711 = vrot.slane %v710, 4
      %v712 = vadd.f32 %v710, %v711
      %v713 = vrot.slane %v712, 2
      %v714 = vadd.f32 %v712, %v713
      %v715 = vrot.slane %v714, 1
      %v716 = vadd.f32 %v714, %v715
      %s717 = vtos %v716
      %v718 = vstv %s717
      %v719 = vrsqrt.pop %v718
      %v720 = vmul.f32 %v718, %v719
      %vm721 = vcmp.eq.f32.partialorder %v718, inf
      %v722 = vsel %vm721, %v718, %v720
      %vm723 = vcmp.eq.f32.partialorder %v718, 0.0
      %v724 = vand.u32 %v718, 2147483648
      %v725 = vsel %vm723, %v724, %v722
      %s726 = vtos %v725
      %s727 = sadd.f32 %s726, 1e-08
      %s728 = smul.f32 %s697, %s727
      %v729 = vstv %s728
      %v730 = vrsqrt.pop %v729
      %v731 = vmul.f32 %v729, %v730
      %vm732 = vcmp.eq.f32.partialorder %v729, inf
      %v733 = vsel %vm732, %v729, %v731
      %vm734 = vcmp.eq.f32.partialorder %v729, 0.0
      %v735 = vand.u32 %v729, 2147483648
      %v736 = vsel %vm734, %v735, %v733
      %s737 = vtos %v736
      %v738 = vstv %s737
      %v739 = vrcp.pop %v738
      %s740 = vtos %v739
      %s741 = smul.f32 %s667, %s740
      %v742 = vstv %s741
      %vm743 = vcmask 0
      %744 = vst.msk [vmem:[#allocation12] sm:$0x1] %vm743, %v742
    $region25: #{tpu_custom_call.1} parent=1 // pred_fallthru
      _
    // Predicated region
    $region26: #{tpu_custom_call.1} parent=1 // pred_check
      _
    $region27: #{tpu_custom_call.1} parent=1 // pred_check_branch
      %746 = sbr.rel (0) target = $region29
    $region28: #{tpu_custom_call.1} parent=1 // pred_region
      %s748 = ssub.s32 16, 16
      %749 = vsyncadd [#allocation9], %s748
      %s751 = sshll.u32 [#allocation12], 4
      %s752 = int_to_ptr.vmem [resolvable:$true] %s751
      %754 = dma.vmem_to_hbm [thread:$0]  %s752, 16, %s2, [#allocation9]
    $region29: #{tpu_custom_call.1} parent=1 // pred_fallthru
      _
    // Predicated region
    $region30: #{tpu_custom_call.1} parent=1 // pred_check
      _
    $region31: #{tpu_custom_call.1} parent=1 // pred_check_branch
      %756 = sbr.rel (0) target = $region33
    $region32: #{tpu_custom_call.1} parent=1 // pred_region
      %757 = dma.done [#allocation9], 16
    $region33: #{tpu_custom_call.1} parent=1 // pred_fallthru
      _
    %758 = vsyncpa [#allocation8], 1
    %759 = vsyncpa [#allocation11], 1
    %760 = vsyncpa [#allocation9], 1

</llo_original>
